<compile_context>
chip_gen: v6e
topology: v6e:2x2x1
jax: 0.10.0
libtpu: 0.0.40
codegen_flags: <defaults>
</compile_context>

<pallas_src>
import jax
import jax.numpy as jnp
from jax.experimental import pallas as pl
from jax.experimental.pallas import tpu as pltpu


def _fast_text_kernel(tok_ref,     # VMEM (TB, S)   int32 token ids
                      table_ref,   # VMEM (tv, CP)  f32   folded (emb@w1@w2)/S tile
                      bias_ref,    # VMEM (1, CP)   f32   folded bias (padded lanes -1e30)
                      out_ref,     # VMEM (TB, CP)  f32   softmax output
                      acc_ref):    # VMEM (TB, CP)  f32   logit accumulator (scratch)
    k = pl.program_id(1)
    nk = pl.num_programs(1)

    @pl.when(k == 0)
    def _():
        acc_ref[...] = jnp.zeros_like(acc_ref)

    tok = tok_ref[...]                         # (TB, S)
    TB, S = tok.shape
    tv = table_ref.shape[0]

    # Bag-of-words counts restricted to this vocab tile, built as S cheap
    # (TB, tv) VPU compare+adds (no 3-D one-hot -> no vreg spills).  Token ids
    # outside [k*tv, (k+1)*tv) simply match nothing.
    tok_local = tok - k * tv
    vocab_iota = jax.lax.broadcasted_iota(jnp.int32, (TB, tv), 1)
    counts = jnp.zeros((TB, tv), jnp.float32)
    for s in range(S):                         # S is small & static -> fully unrolled
        counts = counts + (tok_local[:, s:s + 1] == vocab_iota).astype(jnp.float32)

    # Single lane-dense MXU matmul: partial logits for this vocab tile.
    acc_ref[...] += jnp.dot(counts, table_ref[...],
                            preferred_element_type=jnp.float32)

    @pl.when(k == nk - 1)
    def _():
        # Softmax over the (padded) class lanes; padded lanes carry a -1e30
        # bias so exp() underflows to exactly 0 (keep everything f32).
        logits = acc_ref[...] + bias_ref[...]
        m = jnp.max(logits, axis=-1, keepdims=True)
        e = jnp.exp(logits - m)
        denom = jnp.sum(e, axis=-1, keepdims=True)
        out_ref[...] = e * pl.reciprocal(denom, approx=False)


def fast_text_forward(tokens, emb, w1, b1, w2, b2, *, block_b=128, block_v=2048):
    B, S = tokens.shape
    V, D = emb.shape
    C = w2.shape[1]                            # = 2 classes
    CP = 128                                   # class lanes padded to a full vreg row

    # Fold the fully-linear chain on the host (exact up to fp reassociation):
    #   ((counts @ emb)/S) @ w1 + b1) @ w2 + b2
    #     == counts @ ((emb @ w1 @ w2)/S) + (b1 @ w2 + b2)
    table = jnp.dot(jnp.dot(emb.astype(jnp.float32), w1.astype(jnp.float32)),
                    w2.astype(jnp.float32)) * (1.0 / S)            # (V, C)
    bias = jnp.dot(b1.astype(jnp.float32), w2.astype(jnp.float32)) \
        + b2.astype(jnp.float32)                                   # (1, C)

    # Batch tiling (parallel grid axis).
    if B <= block_b:
        tb, b_pad = B, B
    else:
        tb = block_b                           # multiple of 8
        b_pad = pl.cdiv(B, tb) * tb
    tok = tokens.astype(jnp.int32)
    if b_pad != B:
        tok = jnp.pad(tok, ((0, b_pad - B), (0, 0)))   # pad rows use id 0; sliced off below

    # Vocab tiling (reduction grid axis) -- bounds the table's VMEM footprint.
    if V <= block_v:
        tv, v_pad = V, V
    else:
        tv = block_v                           # multiple of 8
        v_pad = pl.cdiv(V, tv) * tv

    # Class-pad (and vocab-pad) the folded table / bias.  Padded table rows are
    # zero and padded vocab ids never match a real token, so they add nothing;
    # padded class lanes get a -1e30 bias -> exactly 0 after softmax.
    table_p = jnp.zeros((v_pad, CP), jnp.float32).at[:V, :C].set(table)
    bias_p = jnp.full((1, CP), -1e30, jnp.float32).at[:, :C].set(bias)

    out = pl.pallas_call(
        _fast_text_kernel,
        out_shape=jax.ShapeDtypeStruct((b_pad, CP), jnp.float32),
        grid_spec=pltpu.PrefetchScalarGridSpec(
            num_scalar_prefetch=0,
            grid=(b_pad // tb, v_pad // tv),   # (batch parallel, vocab reduction last)
            in_specs=[
                pl.BlockSpec((tb, S), lambda i, k: (i, 0)),    # token ids
                pl.BlockSpec((tv, CP), lambda i, k: (k, 0)),   # folded table tile
                pl.BlockSpec((1, CP), lambda i, k: (0, 0)),    # folded bias
            ],
            out_specs=pl.BlockSpec((tb, CP), lambda i, k: (i, 0)),
            scratch_shapes=[pltpu.VMEM((tb, CP), jnp.float32)],
        ),
        compiler_params=pltpu.CompilerParams(
            dimension_semantics=("parallel", "arbitrary"),
            vmem_limit_bytes=32 * 1024 * 1024,
        ),
    )(tok, table_p, bias_p)

    # Slice off batch padding / padded class lanes; match PyTorch's (B, 1, 2).
    return out[:B, :C].reshape(B, 1, C)


def fast_text_reference(tokens, emb, w1, b1, w2, b2):
    x = jnp.take(emb, tokens, axis=0)          # (B, S, D)   embedding
    x = jnp.mean(x, axis=1, keepdims=True)     # (B, 1, D)   AvgPool1d(kernel=S)
    x = x @ w1 + b1                            # (B, 1, 2D)  fc
    x = x @ w2 + b2                            # (B, 1, 2)   fc2
    return jax.nn.softmax(x, axis=2)


if __name__ == "__main__":
    key = jax.random.PRNGKey(0)
    k_tok, k_emb, k_w1, k_b1, k_w2, k_b2, k_tok2 = jax.random.split(key, 7)

    # Module-consistent toy shapes.
    word_dim, vocab_size, sentence_length = 32, 50, 8
    hidden, num_classes = word_dim * 2, 2

    emb = jax.random.normal(k_emb, (vocab_size, word_dim), jnp.float32) * 0.1
    w1 = jax.random.normal(k_w1, (word_dim, hidden), jnp.float32) * 0.1
    b1 = jax.random.normal(k_b1, (1, hidden), jnp.float32) * 0.1
    w2 = jax.random.normal(k_w2, (hidden, num_classes), jnp.float32) * 0.1
    b2 = jax.random.normal(k_b2, (1, num_classes), jnp.float32) * 0.1

    # Case 1: tiny batch, single-tile grid.
    tokens = jax.random.randint(k_tok, (2, sentence_length), 0, vocab_size,
                                dtype=jnp.int32)
    out = jax.block_until_ready(fast_text_forward(tokens, emb, w1, b1, w2, b2))
    ref = fast_text_reference(tokens, emb, w1, b1, w2, b2)
    assert out.shape == (2, 1, num_classes), out.shape
    assert jnp.allclose(out, ref, atol=1e-5, rtol=1e-5), (out, ref)

    # Case 2: exercise the batch-parallel + vocab-reduction tiling/padding path.
    tokens2 = jax.random.randint(k_tok2, (16, sentence_length), 0, vocab_size,
                                 dtype=jnp.int32)
    out2 = jax.block_until_ready(
        fast_text_forward(tokens2, emb, w1, b1, w2, b2, block_b=8, block_v=16))
    ref2 = fast_text_reference(tokens2, emb, w1, b1, w2, b2)
    assert out2.shape == (16, 1, num_classes), out2.shape
    assert jnp.allclose(out2, ref2, atol=1e-5, rtol=1e-5), (out2, ref2)

    print("KERNEL_OK")
</pallas_src>

<mosaic_0001>
module attributes {stable_mosaic.version = 11 : i64} {
  func.func @_fast_text_kernel(%arg0: i32, %arg1: i32, %arg2: memref<2x8xi32, #tpu.memory_space<vmem>>, %arg3: memref<50x128xf32, #tpu.memory_space<vmem>>, %arg4: memref<1x128xf32, #tpu.memory_space<vmem>>, %arg5: memref<2x128xf32, #tpu.memory_space<vmem>>, %arg6: memref<2x128xf32, #tpu.memory_space<vmem>>) attributes {dimension_semantics = [#tpu.dimension_semantics<parallel>, #tpu.dimension_semantics<arbitrary>], iteration_bounds = array<i64: 1, 1>, scalar_prefetch = 0 : i64, scratch_operands = 1 : i64, tpu.core_type = #tpu.core_type<tc>, window_params = [{transform_indices = @transform_0, window_bounds = array<i64: 2, 8>}, {transform_indices = @transform_1, window_bounds = array<i64: 50, 128>}, {pipeline_mode = #tpu.pipeline_mode<synchronous>, transform_indices = @transform_2, window_bounds = array<i64: 1, 128>}, {transform_indices = @transform_3, window_bounds = array<i64: 2, 128>}]} {
    %c0_i32 = arith.constant 0 : i32
    %0 = arith.cmpi eq, %arg1, %c0_i32 : i32
    %1 = arith.extui %0 : i1 to i32
    %c0_i32_0 = arith.constant 0 : i32
    %2 = arith.cmpi ne, %1, %c0_i32_0 : i32
    scf.if %2 {
      %cst_11 = arith.constant 0.000000e+00 : f32
      %65 = vector.broadcast %cst_11 : f32 to vector<2x128xf32>
      %c0_12 = arith.constant 0 : index
      %c0_13 = arith.constant 0 : index
      %66 = vector.load %arg6[%c0_12, %c0_13] : memref<2x128xf32, #tpu.memory_space<vmem>>, vector<2x128xf32>
      tpu.vector_store %arg6[%c0_12, %c0_13], %65 {strides = array<i32>} : memref<2x128xf32, #tpu.memory_space<vmem>>, vector<2x128xf32>,
    } else {
    }
    %c0 = arith.constant 0 : index
    %c0_1 = arith.constant 0 : index
    %3 = vector.load %arg2[%c0, %c0_1] : memref<2x8xi32, #tpu.memory_space<vmem>>, vector<2x8xi32>
    %c50_i32 = arith.constant 50 : i32
    %4 = arith.muli %arg1, %c50_i32 : i32
    %5 = vector.broadcast %4 : i32 to vector<2x8xi32>
    %6 = arith.subi %3, %5 : vector<2x8xi32>
    %7 = tpu.iota {dimensions = array<i32: 1>} : vector<2x50xi32>
    %cst = arith.constant 0.000000e+00 : f32
    %8 = vector.broadcast %cst : f32 to vector<2x50xf32>
    %9 = vector.extract_strided_slice %6 {offsets = [0, 0], sizes = [2, 1], strides = [1, 1]} : vector<2x8xi32> to vector<2x1xi32>
    %10 = vector.broadcast %9 : vector<2x1xi32> to vector<2x50xi32>
    %11 = arith.cmpi eq, %10, %7 : vector<2x50xi32>
    %12 = arith.extui %11 : vector<2x50xi1> to vector<2x50xi32>
    %13 = arith.sitofp %12 : vector<2x50xi32> to vector<2x50xf32>
    %14 = arith.addf %8, %13 : vector<2x50xf32>
    %15 = vector.extract_strided_slice %6 {offsets = [0, 1], sizes = [2, 1], strides = [1, 1]} : vector<2x8xi32> to vector<2x1xi32>
    %16 = vector.broadcast %15 : vector<2x1xi32> to vector<2x50xi32>
    %17 = arith.cmpi eq, %16, %7 : vector<2x50xi32>
    %18 = arith.extui %17 : vector<2x50xi1> to vector<2x50xi32>
    %19 = arith.sitofp %18 : vector<2x50xi32> to vector<2x50xf32>
    %20 = arith.addf %14, %19 : vector<2x50xf32>
    %21 = vector.extract_strided_slice %6 {offsets = [0, 2], sizes = [2, 1], strides = [1, 1]} : vector<2x8xi32> to vector<2x1xi32>
    %22 = vector.broadcast %21 : vector<2x1xi32> to vector<2x50xi32>
    %23 = arith.cmpi eq, %22, %7 : vector<2x50xi32>
    %24 = arith.extui %23 : vector<2x50xi1> to vector<2x50xi32>
    %25 = arith.sitofp %24 : vector<2x50xi32> to vector<2x50xf32>
    %26 = arith.addf %20, %25 : vector<2x50xf32>
    %27 = vector.extract_strided_slice %6 {offsets = [0, 3], sizes = [2, 1], strides = [1, 1]} : vector<2x8xi32> to vector<2x1xi32>
    %28 = vector.broadcast %27 : vector<2x1xi32> to vector<2x50xi32>
    %29 = arith.cmpi eq, %28, %7 : vector<2x50xi32>
    %30 = arith.extui %29 : vector<2x50xi1> to vector<2x50xi32>
    %31 = arith.sitofp %30 : vector<2x50xi32> to vector<2x50xf32>
    %32 = arith.addf %26, %31 : vector<2x50xf32>
    %33 = vector.extract_strided_slice %6 {offsets = [0, 4], sizes = [2, 1], strides = [1, 1]} : vector<2x8xi32> to vector<2x1xi32>
    %34 = vector.broadcast %33 : vector<2x1xi32> to vector<2x50xi32>
    %35 = arith.cmpi eq, %34, %7 : vector<2x50xi32>
    %36 = arith.extui %35 : vector<2x50xi1> to vector<2x50xi32>
    %37 = arith.sitofp %36 : vector<2x50xi32> to vector<2x50xf32>
    %38 = arith.addf %32, %37 : vector<2x50xf32>
    %39 = vector.extract_strided_slice %6 {offsets = [0, 5], sizes = [2, 1], strides = [1, 1]} : vector<2x8xi32> to vector<2x1xi32>
    %40 = vector.broadcast %39 : vector<2x1xi32> to vector<2x50xi32>
    %41 = arith.cmpi eq, %40, %7 : vector<2x50xi32>
    %42 = arith.extui %41 : vector<2x50xi1> to vector<2x50xi32>
    %43 = arith.sitofp %42 : vector<2x50xi32> to vector<2x50xf32>
    %44 = arith.addf %38, %43 : vector<2x50xf32>
    %45 = vector.extract_strided_slice %6 {offsets = [0, 6], sizes = [2, 1], strides = [1, 1]} : vector<2x8xi32> to vector<2x1xi32>
    %46 = vector.broadcast %45 : vector<2x1xi32> to vector<2x50xi32>
    %47 = arith.cmpi eq, %46, %7 : vector<2x50xi32>
    %48 = arith.extui %47 : vector<2x50xi1> to vector<2x50xi32>
    %49 = arith.sitofp %48 : vector<2x50xi32> to vector<2x50xf32>
    %50 = arith.addf %44, %49 : vector<2x50xf32>
    %51 = vector.extract_strided_slice %6 {offsets = [0, 7], sizes = [2, 1], strides = [1, 1]} : vector<2x8xi32> to vector<2x1xi32>
    %52 = vector.broadcast %51 : vector<2x1xi32> to vector<2x50xi32>
    %53 = arith.cmpi eq, %52, %7 : vector<2x50xi32>
    %54 = arith.extui %53 : vector<2x50xi1> to vector<2x50xi32>
    %55 = arith.sitofp %54 : vector<2x50xi32> to vector<2x50xf32>
    %56 = arith.addf %50, %55 : vector<2x50xf32>
    %c0_2 = arith.constant 0 : index
    %c0_3 = arith.constant 0 : index
    %57 = vector.load %arg6[%c0_2, %c0_3] : memref<2x128xf32, #tpu.memory_space<vmem>>, vector<2x128xf32>
    %c0_4 = arith.constant 0 : index
    %c0_5 = arith.constant 0 : index
    %58 = vector.load %arg3[%c0_4, %c0_5] : memref<50x128xf32, #tpu.memory_space<vmem>>, vector<50x128xf32>
    %cst_6 = arith.constant dense<0.000000e+00> : vector<2x128xf32>
    %59 = tpu.matmul %56, %58, %cst_6 {dimension_numbers = #tpu.dot_dimension_numbers<[1], [0], [0], [1], [0, 0, 1, 1], [], []>} : vector<2x50xf32>, vector<50x128xf32>, vector<2x128xf32> -> vector<2x128xf32>
    %60 = arith.addf %57, %59 : vector<2x128xf32>
    %c0_7 = arith.constant 0 : index
    %c0_8 = arith.constant 0 : index
    %61 = vector.load %arg6[%c0_7, %c0_8] : memref<2x128xf32, #tpu.memory_space<vmem>>, vector<2x128xf32>
    tpu.vector_store %arg6[%c0_7, %c0_8], %60 {strides = array<i32>} : memref<2x128xf32, #tpu.memory_space<vmem>>, vector<2x128xf32>,
    %c0_i32_9 = arith.constant 0 : i32
    %62 = arith.cmpi eq, %arg1, %c0_i32_9 : i32
    %63 = arith.extui %62 : i1 to i32
    %c0_i32_10 = arith.constant 0 : i32
    %64 = arith.cmpi ne, %63, %c0_i32_10 : i32
    scf.if %64 {
      %c0_11 = arith.constant 0 : index
      %c0_12 = arith.constant 0 : index
      %65 = vector.load %arg6[%c0_11, %c0_12] : memref<2x128xf32, #tpu.memory_space<vmem>>, vector<2x128xf32>
      %c0_13 = arith.constant 0 : index
      %c0_14 = arith.constant 0 : index
      %66 = vector.load %arg4[%c0_13, %c0_14] : memref<1x128xf32, #tpu.memory_space<vmem>>, vector<1x128xf32>
      %67 = vector.broadcast %66 : vector<1x128xf32> to vector<2x128xf32>
      %68 = arith.addf %65, %67 : vector<2x128xf32>
      %cst_15 = arith.constant dense<0xFF800000> : vector<2xf32>
      %69 = vector.multi_reduction <maximumf>, %68, %cst_15 [1] : vector<2x128xf32> to vector<2xf32>
      %70 = vector.shape_cast %69 : vector<2xf32> to vector<2x1xf32>
      %71 = vector.broadcast %70 : vector<2x1xf32> to vector<2x128xf32>
      %72 = arith.subf %68, %71 : vector<2x128xf32>
      %73 = math.exp %72 : vector<2x128xf32>
      %cst_16 = arith.constant dense<0.000000e+00> : vector<2xf32>
      %74 = vector.multi_reduction <add>, %73, %cst_16 [1] : vector<2x128xf32> to vector<2xf32>
      %75 = vector.shape_cast %74 : vector<2xf32> to vector<2x1xf32>
      %76 = tpu.reciprocal %75 : vector<2x1xf32> -> vector<2x1xf32>
      %77 = vector.broadcast %76 : vector<2x1xf32> to vector<2x128xf32>
      %78 = arith.mulf %73, %77 : vector<2x128xf32>
      %c0_17 = arith.constant 0 : index
      %c0_18 = arith.constant 0 : index
      %79 = vector.load %arg5[%c0_17, %c0_18] : memref<2x128xf32, #tpu.memory_space<vmem>>, vector<2x128xf32>
      tpu.vector_store %arg5[%c0_17, %c0_18], %78 {strides = array<i32>} : memref<2x128xf32, #tpu.memory_space<vmem>>, vector<2x128xf32>,
    } else {
    }
    return
  }
  func.func @transform_0(%arg0: i32, %arg1: i32) -> (i32, i32) {
    %c0_i32 = arith.constant 0 : i32
    %c0_i32_0 = arith.constant 0 : i32
    return %arg0, %c0_i32 : i32, i32
  }
  func.func @transform_1(%arg0: i32, %arg1: i32) -> (i32, i32) {
    %c0_i32 = arith.constant 0 : i32
    %c0_i32_0 = arith.constant 0 : i32
    return %arg1, %c0_i32 : i32, i32
  }
  func.func @transform_2(%arg0: i32, %arg1: i32) -> (i32, i32) {
    %c0_i32 = arith.constant 0 : i32
    %c0_i32_0 = arith.constant 0 : i32
    %c0_i32_1 = arith.constant 0 : i32
    return %c0_i32, %c0_i32_0 : i32, i32
  }
  func.func @transform_3(%arg0: i32, %arg1: i32) -> (i32, i32) {
    %c0_i32 = arith.constant 0 : i32
    %c0_i32_0 = arith.constant 0 : i32
    return %arg0, %c0_i32 : i32, i32
  }
}

</mosaic_0001>

<llo_original>
// kernel: tpu_custom_call.1
$region0: #{tpu_custom_call.1}
  #allocation0 [shape = 'u32[]', space=smem, size = 0x4, offset = 0x4, fixed_abs, tag = 'smem constant byte address 0x4 - core index']
  #allocation1 [shape = 'u32[144,128]{1,0:T(1,128)}', space=vmem, size = 0x12000, scoped, tag = 'internal scratch']
  #allocation2 [shape = 'f32[2,128]{1,0:T(2,128)}', space=vmem, size = 0x400, scoped, tag = 'scratch operand']
  %s0 = inlined_call_operand.hbm [shape: s32[2,8], index: 0, kind: input, shape index: {}]
  %s1 = inlined_call_operand.hbm [shape: f32[50,128], index: 1, kind: input, shape index: {}]
  %s2 = inlined_call_operand.vmem [shape: f32[1,128], index: 2, kind: input, shape index: {}]
  %s3 = inlined_call_operand.hbm [shape: f32[2,128], index: 3, kind: output, shape index: {}]
  %s4 = sld [smem:[#allocation0]]
  $region38: #{tpu_custom_call.1} parent=0
    _
  %s6 = ssub.s32 1, %s4
  %s7 = scalar_select 0, %s6, %s4
  $region1: #{tpu_custom_call.1} parent=0
    #allocation3 [shape = 'u8[1024]{0}', space=vmem, size = 0x400, scoped, tag = 'input window, operand 0, single buffered']
    #allocation4 [shape = 's32[1]{0}', space=sflag, size = 0x4, scoped, tag = 'scoped memory for tpu_custom_call.1']
    #allocation5 [shape = 's32[1]{0}', space=sflag, size = 0x4, scoped, tag = 'scoped memory for tpu_custom_call.1']
    #allocation6 [shape = 'u8[28672]{0}', space=vmem, size = 0x7000, scoped, tag = 'input window, operand 1, single buffered']
    #allocation7 [shape = 's32[1]{0}', space=sflag, size = 0x4, scoped, tag = 'scoped memory for tpu_custom_call.1']
    #allocation8 [shape = 'u8[1024]{0}', space=vmem, size = 0x400, scoped, tag = 'output window, operand 0, single buffered']
    %8 = vsyncpa [#allocation4], 0
    %9 = vsyncpa [#allocation7], 0
    %10 = vsyncpa [#allocation5], 0
    // Predicated region
    $region2: #{tpu_custom_call.1} parent=1 // pred_check
      _
    $region3: #{tpu_custom_call.1} parent=1 // pred_check_branch
      %12 = sbr.rel (0) target = $region5
    $region4: #{tpu_custom_call.1} parent=1 // pred_region
      %s14 = ssub.s32 32, 32
      %15 = vsyncadd [#allocation4], %s14
      %s17 = sshll.u32 [#allocation3], 4
      %s18 = int_to_ptr.vmem [resolvable:$true] %s17
      %20 = dma.hbm_to_vmem [thread:$0]  %s0, 32, %s18, [#allocation4]
    $region5: #{tpu_custom_call.1} parent=1 // pred_fallthru
      _
    // Predicated region
    $region6: #{tpu_custom_call.1} parent=1 // pred_check
      _
    $region7: #{tpu_custom_call.1} parent=1 // pred_check_branch
      %22 = sbr.rel (0) target = $region9
    $region8: #{tpu_custom_call.1} parent=1 // pred_region
      %s24 = ssub.s32 896, 896
      %25 = vsyncadd [#allocation7], %s24
      %s26 = sshll.u32 [#allocation6], 4
      %s27 = int_to_ptr.vmem [resolvable:$true] %s26
      %32 = dma.hbm_to_vmem [thread:$0]  %s1, 896, %s27, [#allocation7], 128, 128, 8
    $region9: #{tpu_custom_call.1} parent=1 // pred_fallthru
      _
    // Predicated region
    $region10: #{tpu_custom_call.1} parent=1 // pred_check
      _
    $region11: #{tpu_custom_call.1} parent=1 // pred_check_branch
      %34 = sbr.rel (0) target = $region13
    $region12: #{tpu_custom_call.1} parent=1 // pred_region
      _
    $region13: #{tpu_custom_call.1} parent=1 // pred_fallthru
      _
    // Predicated region
    $region14: #{tpu_custom_call.1} parent=1 // pred_check
      _
    $region15: #{tpu_custom_call.1} parent=1 // pred_check_branch
      %36 = sbr.rel (0) target = $region17
    $region16: #{tpu_custom_call.1} parent=1 // pred_region
      %37 = dma.done [#allocation4], 32
    $region17: #{tpu_custom_call.1} parent=1 // pred_fallthru
      _
    // Predicated region
    $region18: #{tpu_custom_call.1} parent=1 // pred_check
      _
    $region19: #{tpu_custom_call.1} parent=1 // pred_check_branch
      %39 = sbr.rel (0) target = $region21
    $region20: #{tpu_custom_call.1} parent=1 // pred_region
      %40 = dma.done [#allocation7], 896
    $region21: #{tpu_custom_call.1} parent=1 // pred_fallthru
      _
    %p41 = scmp.eq.s32.totalorder 0, 0
    // Predicated region
    $region22: #{tpu_custom_call.1} parent=1 // pred_check
      %p42 = pneg %p41
    $region23: #{tpu_custom_call.1} parent=1 // pred_check_branch
      %44 = sbr.rel (%p42) target = $region25
    $region24: #{tpu_custom_call.1} parent=1 // pred_region
      %45 = vst [vmem:[#allocation2] sm:$0x3] 0.0
    $region25: #{tpu_custom_call.1} parent=1 // pred_fallthru
      _
    %v46 = vld [vmem:[#allocation3] sm:$0x3]
    %s47 = smul.u32 0, 50
    %v48 = vstv %s47
    %v49 = vsub.s32 %v46, %v48
    %v50 = vlaneseq
    %v51 = vand.u32 %v50, 127
    %52 = vset.pattern.permute.xlu0 0
    %53 = vperm.xlu0 %52, %v49
    %v54 = vpop.permute.xlu0 %53
    %vm55 = vcmp.eq.s32.totalorder %v54, %v51
    %v56 = vsel %vm55, 1, 0
    %v57 = vcvt.s32.f32 %v56
    %v58 = vadd.f32 %v57, 0.0
    %59 = vset.pattern.permute.xlu0 1
    %60 = vperm.xlu0 %59, %v49
    %v61 = vpop.permute.xlu0 %60
    %vm62 = vcmp.eq.s32.totalorder %v61, %v51
    %v63 = vsel %vm62, 1, 0
    %v64 = vcvt.s32.f32 %v63
    %v65 = vadd.f32 %v58, %v64
    %66 = vset.pattern.permute.xlu0 2
    %67 = vperm.xlu0 %66, %v49
    %v68 = vpop.permute.xlu0 %67
    %vm69 = vcmp.eq.s32.totalorder %v68, %v51
    %v70 = vsel %vm69, 1, 0
    %v71 = vcvt.s32.f32 %v70
    %v72 = vadd.f32 %v65, %v71
    %73 = vset.pattern.permute.xlu0 3
    %74 = vperm.xlu0 %73, %v49
    %v75 = vpop.permute.xlu0 %74
    %vm76 = vcmp.eq.s32.totalorder %v75, %v51
    %v77 = vsel %vm76, 1, 0
    %v78 = vcvt.s32.f32 %v77
    %v79 = vadd.f32 %v72, %v78
    %80 = vset.pattern.permute.xlu0 4
    %81 = vperm.xlu0 %80, %v49
    %v82 = vpop.permute.xlu0 %81
    %vm83 = vcmp.eq.s32.totalorder %v82, %v51
    %v84 = vsel %vm83, 1, 0
    %v85 = vcvt.s32.f32 %v84
    %v86 = vadd.f32 %v79, %v85
    %87 = vset.pattern.permute.xlu0 5
    %88 = vperm.xlu0 %87, %v49
    %v89 = vpop.permute.xlu0 %88
    %vm90 = vcmp.eq.s32.totalorder %v89, %v51
    %v91 = vsel %vm90, 1, 0
    %v92 = vcvt.s32.f32 %v91
    %v93 = vadd.f32 %v86, %v92
    %94 = vset.pattern.permute.xlu0 6
    %95 = vperm.xlu0 %94, %v49
    %v96 = vpop.permute.xlu0 %95
    %vm97 = vcmp.eq.s32.totalorder %v96, %v51
    %v98 = vsel %vm97, 1, 0
    %v99 = vcvt.s32.f32 %v98
    %v100 = vadd.f32 %v93, %v99
    %101 = vset.pattern.permute.xlu0 7
    %102 = vperm.xlu0 %101, %v49
    %v103 = vpop.permute.xlu0 %102
    %vm104 = vcmp.eq.s32.totalorder %v103, %v51
    %v105 = vsel %vm104, 1, 0
    %v106 = vcvt.s32.f32 %v105
    %v107 = vadd.f32 %v100, %v106
    %v108 = vld [vmem:[#allocation2] sm:$0x3]
    %v109 = vld [vmem:[#allocation6] sm:$0xff]
    %v110 = vld [vmem:[#allocation6 + $0x8] sm:$0xff]
    %v111 = vld [vmem:[#allocation6 + $0x10] sm:$0xff]
    %v112 = vld [vmem:[#allocation6 + $0x18] sm:$0xff]
    %v113 = vld [vmem:[#allocation6 + $0x20] sm:$0xff]
    %v114 = vld [vmem:[#allocation6 + $0x28] sm:$0xff]
    %v115 = vld [vmem:[#allocation6 + $0x30] sm:$0x3]
    %vm116 = vcmask 408576
    %v118 = vsel %vm116, %v107, 0
    %vm120 = vcmask 1041408
    %v122 = vsel %vm120, %v115, 0
    %124 = vmatprep.subr.mxu0 0.0
    %125 = vmatpush1.msra.mxu0 0.0
    %126 = vmatprep.subr.mxu0 0.0
    %127 = vmatpush1.msra.mxu0 0.0
    %128 = vmatprep.subr.mxu0 0.0
    %129 = vmatpush1.msra.mxu0 0.0
    %130 = vmatprep.subr.mxu0 0.0
    %131 = vmatpush1.msra.mxu0 0.0
    %132 = vmatprep.subr.mxu0 0.0
    %133 = vmatpush1.msra.mxu0 0.0
    %134 = vmatprep.subr.mxu0 0.0
    %135 = vmatpush1.msra.mxu0 0.0
    %136 = vmatprep.subr.mxu0 0.0
    %137 = vmatpush1.msra.mxu0 0.0
    %138 = vmatprep.subr.mxu0 0.0
    %139 = vmatpush1.msra.mxu0 0.0
    %140 = vmatprep.subr.mxu0 0.0
    %141 = vmatpush1.msra.mxu0 0.0
    %142 = vmatprep.subr.mxu0 0.0
    %143 = vmatpush1.msra.mxu0 %v122
    %144 = vmatprep.subr.mxu0 0.0
    %145 = vmatpush1.msra.mxu0 %v114
    %146 = vmatprep.subr.mxu0 0.0
    %147 = vmatpush1.msra.mxu0 %v113
    %148 = vmatprep.subr.mxu0 0.0
    %149 = vmatpush1.msra.mxu0 %v112
    %150 = vmatprep.subr.mxu0 0.0
    %151 = vmatpush1.msra.mxu0 %v111
    %152 = vmatprep.subr.mxu0 0.0
    %153 = vmatpush1.msra.mxu0 %v110
    %154 = vmatprep.subr.mxu0 0.0
    %155 = vmatpush1.msra.mxu0 %v109
    %156 = vmatprep.subr.mxu0 0.0
    %157 = vmatpush2.msra.mxu0 0.0
    %158 = vmatprep.subr.mxu0 0.0
    %159 = vmatpush2.msra.mxu0 0.0
    %160 = vmatprep.subr.mxu0 0.0
    %161 = vmatpush2.msra.mxu0 0.0
    %162 = vmatprep.subr.mxu0 0.0
    %163 = vmatpush2.msra.mxu0 0.0
    %164 = vmatprep.subr.mxu0 0.0
    %165 = vmatpush2.msra.mxu0 0.0
    %166 = vmatprep.subr.mxu0 0.0
    %167 = vmatpush2.msra.mxu0 0.0
    %168 = vmatprep.subr.mxu0 0.0
    %169 = vmatpush2.msra.mxu0 0.0
    %170 = vmatprep.subr.mxu0 0.0
    %171 = vmatpush2.msra.mxu0 0.0
    %172 = vmatprep.subr.mxu0 0.0
    %173 = vmatpush2.msra.mxu0 0.0
    %174 = vmatprep.subr.mxu0 0.0
    %175 = vmatpush2.msra.mxu0 0.0
    %176 = vmatprep.subr.mxu0 0.0
    %177 = vmatpush2.msra.mxu0 0.0
    %178 = vmatprep.subr.mxu0 0.0
    %179 = vmatpush2.msra.mxu0 0.0
    %180 = vmatprep.subr.mxu0 0.0
    %181 = vmatpush2.msra.mxu0 0.0
    %182 = vmatprep.subr.mxu0 0.0
    %183 = vmatpush2.msra.mxu0 0.0
    %184 = vmatprep.subr.mxu0 0.0
    %185 = vmatpush2.msra.mxu0 0.0
    %186 = vmatprep.subr.mxu0 0.0
    %187 = vmatpush2.msra.mxu0 0.0
    %188 = vmatprep.mubr.f32.mxu0 0.0
    %189 = vmatmul.mubr.f32.gmra.mxu0 %v118
    %v190 = vpop.f32.mrf.mxu0
    %v191 = vadd.f32 0.0, %v190
    %v192 = vpop.f32.mrf.mxu0
    %193 = vdwg.mxu0
    %v194 = vadd.f32 %v108, %v191
    %195 = vst [vmem:[#allocation2] sm:$0x3] %v194
    // Predicated region
    $region26: #{tpu_custom_call.1} parent=1 // pred_check
      %p196 = pneg %p41
    $region27: #{tpu_custom_call.1} parent=1 // pred_check_branch
      %198 = sbr.rel (%p196) target = $region29
    $region28: #{tpu_custom_call.1} parent=1 // pred_region
      %v199 = vld [vmem:[#allocation2] sm:$0x3]
      %v200 = vld [vmem:[%s2] sm:$0x1]
      %v202 = vlaneseq
      %v203 = vshrl.u32 %v202, 7
      %v204 = vsub.s32 0, %v203
      %v205 = vrot.slane %v200, %v204
      %v207 = vadd.f32 %v199, %v205
      %v208 = vsel %vm120, %v207, -inf
      %209 = vmax.xlane.f32.xlu0 %v208
      %v210 = vpop.xlane.xlu0 %209
      %v211 = vsub.f32 %v207, %v210
      %v212 = vmul.f32 %v211, 1.442695
      %v213 = vpow.pop %v212
      %v214 = vsel %vm120, %v213, 0.0
      %215 = vadd.xlane.f32.xlu0 %v214
      %v216 = vpop.xlane.xlu0 %215
      %v217 = vrcp.pop %v216
      %v218 = vmul.f32 %v213, %v217
      %219 = vst [vmem:[#allocation8] sm:$0x3] %v218
    $region29: #{tpu_custom_call.1} parent=1 // pred_fallthru
      _
    // Predicated region
    $region30: #{tpu_custom_call.1} parent=1 // pred_check
      _
    $region31: #{tpu_custom_call.1} parent=1 // pred_check_branch
      %221 = sbr.rel (0) target = $region33
    $region32: #{tpu_custom_call.1} parent=1 // pred_region
      %s223 = ssub.s32 32, 32
      %224 = vsyncadd [#allocation5], %s223
      %s226 = sshll.u32 [#allocation8], 4
      %s227 = int_to_ptr.vmem [resolvable:$true] %s226
      %229 = dma.vmem_to_hbm [thread:$0]  %s227, 32, %s3, [#allocation5]
    $region33: #{tpu_custom_call.1} parent=1 // pred_fallthru
      _
    // Predicated region
    $region34: #{tpu_custom_call.1} parent=1 // pred_check
      _
    $region35: #{tpu_custom_call.1} parent=1 // pred_check_branch
      %231 = sbr.rel (0) target = $region37
    $region36: #{tpu_custom_call.1} parent=1 // pred_region
      %232 = dma.done [#allocation5], 32
    $region37: #{tpu_custom_call.1} parent=1 // pred_fallthru
      _
    %233 = vsyncpa [#allocation4], 1
    %234 = vsyncpa [#allocation7], 1
    %235 = vsyncpa [#allocation5], 1

</llo_original>
